<compile_context>
chip_gen: v6e
topology: v6e:2x2x1
jax: 0.10.0
libtpu: 0.0.40
codegen_flags: <defaults>
</compile_context>

<pallas_src>
import math
import jax
import jax.numpy as jnp
from jax.experimental import pallas as pl
from jax.experimental.pallas import tpu as pltpu

# Column offsets inside the concatenated output:
#   scaling : 0:3
#   rotation: 3:7
#   opacity : 7:8
#   shs     : 8:11
#   xyz     : 11:14
TOTAL_OUT = 14
PAD_OUT = 16            # padded to 16 lanes for a clean, fixed output width
MAX_STEP = 1.2 / 32.0


def _round_up(a, m):
    return ((a + m - 1) // m) * m


def _gaussian_decoder_kernel(x_ref, pc_ref, w_ref, b_ref, out_ref):
    x = x_ref[...]                                    # (TN, C)   f32 or bf16
    w = w_ref[...]                                    # (C, 16)   f32 or bf16
    b = b_ref[...]                                    # (1, 16)   f32

    # Fused matmul for all five heads on the MXU, f32 accumulation.
    y = jnp.dot(x, w, preferred_element_type=jnp.float32) + b    # (TN, 16)

    # --- scaling (lanes 0:3): trunc_exp forward then clamp to [0, 0.02] ---
    scal = jnp.clip(jnp.exp(y[:, 0:3]), 0.0, 0.02)

    # --- rotation (lanes 3:7): F.normalize (p=2, dim=1, eps=1e-12) ---
    r = y[:, 3:7]
    sumsq = jnp.sum(r * r, axis=-1, keepdims=True)
    rot = r * jax.lax.rsqrt(jnp.maximum(sumsq, 1e-24))   # == r / max(|r|, 1e-12)

    # --- opacity/shs/xyz: ONE sigmoid over the contiguous 7-lane slice ---
    sig = jax.nn.sigmoid(y[:, 7:14])
    opa_shs = sig[:, 0:4]                                    # opacity(1) + shs(3)
    xyz = (sig[:, 4:7] - 0.5) * MAX_STEP + pc_ref[...]       # pc stays f32

    pad = jnp.zeros((x.shape[0], PAD_OUT - TOTAL_OUT), jnp.float32)

    # Single lane-dense store of the whole (TN, 16) result.
    out_ref[...] = jnp.concatenate([scal, rot, opa_shs, xyz, pad], axis=-1)


def gaussian_decoder_forward(x, pc, w_cat, b_cat, *, tile_n=2048,
                             compute_dtype=jnp.float32):
    """x: (N, C), pc: (N, 3) f32, w_cat: (C, 14), b_cat: (1, 14).

    compute_dtype=jnp.bfloat16 casts x and w_cat to bf16 (accumulation and
    activations stay f32).  NOTE: the cast here is an extra XLA pass over x;
    to actually save HBM bandwidth, pass x already in bf16.
    """
    n, c = x.shape
    assert w_cat.shape == (c, TOTAL_OUT)
    assert pc.shape == (n, 3)

    # Pad weights / bias to 16 output lanes (extra columns are zero).
    w16 = jnp.zeros((c, PAD_OUT), jnp.float32).at[:, :TOTAL_OUT].set(w_cat)
    b16 = jnp.zeros((1, PAD_OUT), jnp.float32).at[:, :TOTAL_OUT].set(
        b_cat.reshape(1, TOTAL_OUT))

    # Tile selection: big tiles to amortize per-step overhead.  If everything
    # fits in one tile, split into two grid steps so both v7x TensorCores get
    # work.  Tiles need not divide N (partial last block is masked by Pallas).
    tile = min(tile_n, _round_up(n, 8))
    if tile >= n and n > 16:
        tile = _round_up(pl.cdiv(n, 2), 8)
    tile = max(tile, 8)
    grid = (pl.cdiv(n, tile),)

    if compute_dtype != jnp.float32:
        x = x.astype(compute_dtype)
        w16 = w16.astype(compute_dtype)

    row_map = lambda i: (i, 0)
    rep_map = lambda i: (0, 0)

    out = pl.pallas_call(
        _gaussian_decoder_kernel,
        out_shape=jax.ShapeDtypeStruct((n, PAD_OUT), jnp.float32),
        grid_spec=pltpu.PrefetchScalarGridSpec(
            num_scalar_prefetch=0,
            grid=grid,
            in_specs=[
                pl.BlockSpec((tile, c), row_map),          # x
                pl.BlockSpec((tile, 3), row_map),          # pc
                pl.BlockSpec((c, PAD_OUT), rep_map),       # W concat (padded)
                pl.BlockSpec((1, PAD_OUT), rep_map),       # b concat (padded)
            ],
            out_specs=pl.BlockSpec((tile, PAD_OUT), row_map),
        ),
        compiler_params=pltpu.CompilerParams(
            dimension_semantics=("parallel",),
            vmem_limit_bytes=32 * 1024 * 1024,   # safe on v5e/v6e/v7x
        ),
    )(x, pc, w16, b16)

    scal = out[:, 0:3]
    rot = out[:, 3:7]
    opa = out[:, 7:8]
    shs = out[:, 8:11].reshape(n, -1, 3)       # matches torch.reshape (N,-1,3)
    xyz = out[:, 11:14]
    # GaussianModel(xyz=..., opacity=..., rotation=..., scaling=..., shs=...)
    return {"xyz": xyz, "opacity": opa, "rotation": rot,
            "scaling": scal, "shs": shs}


def gaussian_decoder_ref(x, pc, w_cat, b_cat):
    """Pure-JAX reference mirroring the PyTorch forward."""
    y = x @ w_cat + b_cat
    scal = jnp.clip(jnp.exp(y[:, 0:3]), 0.0, 0.02)
    r = y[:, 3:7]
    nrm = jnp.sqrt(jnp.sum(r * r, axis=-1, keepdims=True))
    rot = r / jnp.maximum(nrm, 1e-12)
    opa = jax.nn.sigmoid(y[:, 7:8])
    shs = jax.nn.sigmoid(y[:, 8:11]).reshape(x.shape[0], -1, 3)
    xyz = (jax.nn.sigmoid(y[:, 11:14]) - 0.5) * MAX_STEP + pc
    return {"xyz": xyz, "opacity": opa, "rotation": rot,
            "scaling": scal, "shs": shs}


def init_params(key, hidden=256):
    """Deterministic synthetic init mirroring nn.Linear defaults + overrides."""
    keys = jax.random.split(key, 10)
    bound = 1.0 / math.sqrt(hidden)

    def lin(kw, kb, out_ch):
        w = jax.random.uniform(kw, (hidden, out_ch), jnp.float32, -bound, bound)
        b = jax.random.uniform(kb, (out_ch,), jnp.float32, -bound, bound)
        return w, b

    w_scal, _ = lin(keys[0], keys[1], 3)
    b_scal = jnp.full((3,), -5.0, jnp.float32)                       # bias = -5.0

    w_rot, _ = lin(keys[2], keys[3], 4)
    b_rot = jnp.array([1.0, 0.0, 0.0, 0.0], jnp.float32)             # bias[0]=1

    w_opa, _ = lin(keys[4], keys[5], 1)
    b_opa = jnp.full((1,), math.log(0.1 / (1 - 0.1)), jnp.float32)   # logit(0.1)

    w_shs, b_shs = lin(keys[6], keys[7], 3)
    w_xyz, b_xyz = lin(keys[8], keys[9], 3)

    w_cat = jnp.concatenate([w_scal, w_rot, w_opa, w_shs, w_xyz], axis=1)   # (256,14)
    b_cat = jnp.concatenate([b_scal, b_rot, b_opa, b_shs, b_xyz])[None, :]  # (1,14)
    return w_cat, b_cat


if __name__ == "__main__":
    key = jax.random.PRNGKey(0)
    k_x, k_pc, k_p = jax.random.split(key, 3)

    # Small demo shapes: decoder heads are Linear(256, .) -> feature dim 256.
    # N deliberately NOT a multiple of the tile to exercise the partial-block
    # (un-padded) path.
    N, C = 200, 256
    x = jax.random.normal(k_x, (N, C), jnp.float32)
    pc = jax.random.normal(k_pc, (N, 3), jnp.float32)
    w_cat, b_cat = init_params(k_p, hidden=C)

    # f32 path
    out = gaussian_decoder_forward(x, pc, w_cat, b_cat)
    jax.block_until_ready(out)

    ref = gaussian_decoder_ref(x, pc, w_cat, b_cat)
    assert out["scaling"].shape == (N, 3)
    assert out["rotation"].shape == (N, 4)
    assert out["opacity"].shape == (N, 1)
    assert out["shs"].shape == (N, 1, 3)
    assert out["xyz"].shape == (N, 3)
    for k in ref:
        assert jnp.allclose(out[k], ref[k], atol=1e-5, rtol=1e-5), k

    # Optional bf16 fast path (pays off when the caller supplies bf16 x).
    out_bf16 = gaussian_decoder_forward(x, pc, w_cat, b_cat,
                                        compute_dtype=jnp.bfloat16)
    jax.block_until_ready(out_bf16)
    for k in ref:
        assert jnp.allclose(out_bf16[k], ref[k], atol=1e-1), k

    print("KERNEL_OK")
</pallas_src>

<mosaic_0001>
module attributes {stable_mosaic.version = 11 : i64} {
  func.func @_gaussian_decoder_kernel(%arg0: i32, %arg1: memref<104x256xf32, #tpu.memory_space<vmem>>, %arg2: memref<104x3xf32, #tpu.memory_space<vmem>>, %arg3: memref<256x16xf32, #tpu.memory_space<vmem>>, %arg4: memref<1x16xf32, #tpu.memory_space<vmem>>, %arg5: memref<104x16xf32, #tpu.memory_space<vmem>>) attributes {dimension_semantics = [#tpu.dimension_semantics<parallel>], iteration_bounds = array<i64: 2>, scalar_prefetch = 0 : i64, scratch_operands = 0 : i64, tpu.core_type = #tpu.core_type<tc>, window_params = [{transform_indices = @transform_0, window_bounds = array<i64: 104, 256>}, {transform_indices = @transform_1, window_bounds = array<i64: 104, 3>}, {pipeline_mode = #tpu.pipeline_mode<synchronous>, transform_indices = @transform_2, window_bounds = array<i64: 256, 16>}, {pipeline_mode = #tpu.pipeline_mode<synchronous>, transform_indices = @transform_3, window_bounds = array<i64: 1, 16>}, {transform_indices = @transform_4, window_bounds = array<i64: 104, 16>}]} {
    %c0 = arith.constant 0 : index
    %c0_0 = arith.constant 0 : index
    %0 = vector.load %arg1[%c0, %c0_0] : memref<104x256xf32, #tpu.memory_space<vmem>>, vector<104x256xf32>
    %c0_1 = arith.constant 0 : index
    %c0_2 = arith.constant 0 : index
    %1 = vector.load %arg3[%c0_1, %c0_2] : memref<256x16xf32, #tpu.memory_space<vmem>>, vector<256x16xf32>
    %c0_3 = arith.constant 0 : index
    %c0_4 = arith.constant 0 : index
    %2 = vector.load %arg4[%c0_3, %c0_4] : memref<1x16xf32, #tpu.memory_space<vmem>>, vector<1x16xf32>
    %cst = arith.constant dense<0.000000e+00> : vector<104x16xf32>
    %3 = tpu.matmul %0, %1, %cst {dimension_numbers = #tpu.dot_dimension_numbers<[1], [0], [0], [1], [0, 0, 1, 1], [], []>} : vector<104x256xf32>, vector<256x16xf32>, vector<104x16xf32> -> vector<104x16xf32>
    %4 = vector.broadcast %2 : vector<1x16xf32> to vector<104x16xf32>
    %5 = arith.addf %3, %4 : vector<104x16xf32>
    %6 = vector.extract_strided_slice %5 {offsets = [0, 0], sizes = [104, 3], strides = [1, 1]} : vector<104x16xf32> to vector<104x3xf32>
    %7 = math.exp %6 : vector<104x3xf32>
    %cst_5 = arith.constant 0.000000e+00 : f32
    %cst_6 = arith.constant 2.000000e-02 : f32
    %8 = vector.broadcast %cst_5 : f32 to vector<104x3xf32>
    %9 = arith.maximumf %8, %7 : vector<104x3xf32>
    %10 = vector.broadcast %cst_6 : f32 to vector<104x3xf32>
    %11 = arith.minimumf %10, %9 : vector<104x3xf32>
    %12 = vector.extract_strided_slice %5 {offsets = [0, 3], sizes = [104, 4], strides = [1, 1]} : vector<104x16xf32> to vector<104x4xf32>
    %13 = arith.mulf %12, %12 : vector<104x4xf32>
    %cst_7 = arith.constant dense<0.000000e+00> : vector<104xf32>
    %14 = vector.multi_reduction <add>, %13, %cst_7 [1] : vector<104x4xf32> to vector<104xf32>
    %15 = vector.shape_cast %14 : vector<104xf32> to vector<104x1xf32>
    %cst_8 = arith.constant 1.000000e-24 : f32
    %16 = vector.broadcast %cst_8 : f32 to vector<104x1xf32>
    %17 = arith.maximumf %15, %16 : vector<104x1xf32>
    %18 = math.rsqrt %17 : vector<104x1xf32>
    %19 = vector.broadcast %18 : vector<104x1xf32> to vector<104x4xf32>
    %20 = arith.mulf %12, %19 : vector<104x4xf32>
    %21 = vector.extract_strided_slice %5 {offsets = [0, 7], sizes = [104, 7], strides = [1, 1]} : vector<104x16xf32> to vector<104x7xf32>
    %22 = arith.negf %21 : vector<104x7xf32>
    %23 = math.exp %22 : vector<104x7xf32>
    %cst_9 = arith.constant 1.000000e+00 : f32
    %24 = vector.broadcast %cst_9 : f32 to vector<104x7xf32>
    %25 = arith.addf %24, %23 : vector<104x7xf32>
    %26 = arith.divf %24, %25 : vector<104x7xf32>
    %27 = vector.extract_strided_slice %26 {offsets = [0, 0], sizes = [104, 4], strides = [1, 1]} : vector<104x7xf32> to vector<104x4xf32>
    %28 = vector.extract_strided_slice %26 {offsets = [0, 4], sizes = [104, 3], strides = [1, 1]} : vector<104x7xf32> to vector<104x3xf32>
    %cst_10 = arith.constant 5.000000e-01 : f32
    %29 = vector.broadcast %cst_10 : f32 to vector<104x3xf32>
    %30 = arith.subf %28, %29 : vector<104x3xf32>
    %cst_11 = arith.constant 3.750000e-02 : f32
    %31 = vector.broadcast %cst_11 : f32 to vector<104x3xf32>
    %32 = arith.mulf %30, %31 : vector<104x3xf32>
    %c0_12 = arith.constant 0 : index
    %c0_13 = arith.constant 0 : index
    %33 = vector.load %arg2[%c0_12, %c0_13] : memref<104x3xf32, #tpu.memory_space<vmem>>, vector<104x3xf32>
    %34 = arith.addf %32, %33 : vector<104x3xf32>
    %cst_14 = arith.constant 0.000000e+00 : f32
    %35 = vector.broadcast %cst_14 : f32 to vector<104x2xf32>
    %36 = tpu.concatenate %11, %20, %27, %34, %35 in 1 : vector<104x3xf32>, vector<104x4xf32>, vector<104x4xf32>, vector<104x3xf32>, vector<104x2xf32> -> vector<104x16xf32>
    %c0_15 = arith.constant 0 : index
    %c0_16 = arith.constant 0 : index
    %37 = vector.load %arg5[%c0_15, %c0_16] : memref<104x16xf32, #tpu.memory_space<vmem>>, vector<104x16xf32>
    tpu.vector_store %arg5[%c0_15, %c0_16], %36 {strides = array<i32>} : memref<104x16xf32, #tpu.memory_space<vmem>>, vector<104x16xf32>,
    return
  }
  func.func @transform_0(%arg0: i32) -> (i32, i32) {
    %c0_i32 = arith.constant 0 : i32
    %c0_i32_0 = arith.constant 0 : i32
    return %arg0, %c0_i32 : i32, i32
  }
  func.func @transform_1(%arg0: i32) -> (i32, i32) {
    %c0_i32 = arith.constant 0 : i32
    %c0_i32_0 = arith.constant 0 : i32
    return %arg0, %c0_i32 : i32, i32
  }
  func.func @transform_2(%arg0: i32) -> (i32, i32) {
    %c0_i32 = arith.constant 0 : i32
    %c0_i32_0 = arith.constant 0 : i32
    %c0_i32_1 = arith.constant 0 : i32
    return %c0_i32, %c0_i32_0 : i32, i32
  }
  func.func @transform_3(%arg0: i32) -> (i32, i32) {
    %c0_i32 = arith.constant 0 : i32
    %c0_i32_0 = arith.constant 0 : i32
    %c0_i32_1 = arith.constant 0 : i32
    return %c0_i32, %c0_i32_0 : i32, i32
  }
  func.func @transform_4(%arg0: i32) -> (i32, i32) {
    %c0_i32 = arith.constant 0 : i32
    %c0_i32_0 = arith.constant 0 : i32
    return %arg0, %c0_i32 : i32, i32
  }
}

</mosaic_0001>

<llo_original>
// kernel: tpu_custom_call.1
$region0: #{tpu_custom_call.1}
  #allocation0 [shape = 'u32[]', space=smem, size = 0x4, offset = 0x4, fixed_abs, tag = 'smem constant byte address 0x4 - core index']
  #allocation1 [shape = 'u32[144,128]{1,0:T(1,128)}', space=vmem, size = 0x12000, scoped, tag = 'internal scratch']
  %s0 = inlined_call_operand.vmem [shape: f32[200,256], index: 0, kind: input, shape index: {}]
  %s1 = inlined_call_operand.vmem [shape: f32[200,3], index: 1, kind: input, shape index: {}]
  %s2 = inlined_call_operand.vmem [shape: f32[256,16], index: 2, kind: input, shape index: {}]
  %s3 = inlined_call_operand.vmem [shape: f32[1,16], index: 3, kind: input, shape index: {}]
  %s4 = inlined_call_operand.vmem [shape: f32[200,16], index: 4, kind: output, shape index: {}]
  %s5 = sld [smem:[#allocation0]]
  $region97: #{tpu_custom_call.1} parent=0
    _
  %s7 = ssub.s32 1, %s5
  %s8 = scalar_select 0, %s7, %s5
  $region1: #{tpu_custom_call.1} parent=0
    #allocation2 [shape = 'u8[106496]{0}', space=vmem, size = 0x1a000, scoped, tag = 'output window, operand 0']
    loop: start=0, step=1, limit=4
    $region2: #{tpu_custom_call.1} parent=1 // loop_pre_header
      _
    $region3: #{tpu_custom_call.1} parent=1 // loop_header
      %s10 = sphi 0, %s14
      %p11 = scmp.ge.s32.totalorder %s10, 4
      %s20 = sphi 0, %s22
      %s23 = sphi 0, %s20
      %s24 = sphi 0, %s23
      %s40 = sphi 0, %s24
      %s46 = sphi 0, %s48
      %s49 = sphi 0, %s46
      %s50 = sphi 0, %s49
      %s66 = sphi 0, %s50
      %s70 = sphi 0, %s70
      %s72 = sphi 0, %s70
      %s73 = sphi 0, %s72
      %s87 = sphi 0, %s73
      %s91 = sphi 0, %s91
      %s93 = sphi 0, %s91
      %s94 = sphi 0, %s93
      %s108 = sphi 0, %s94
      %s114 = sphi 0, %s116
      %s117 = sphi 0, %s114
      %s118 = sphi 0, %s117
      %s134 = sphi 0, %s118
    $region4: #{tpu_custom_call.1} parent=1 // loop_header_branch
      %13 = sbr.rel (%p11) target = $region8
    $region5: #{tpu_custom_call.1} parent=1 // loop_body
      %s15 = ssub.s32 %s10, 1
      %s16 = ssub.s32 %s10, 2
      %s17 = sadd.s32 %s10, 1
      %s18 = ssub.s32 %s10, %s17
      %p19 = scmp.eq.s32.totalorder %s18, 0
      %s21 = sadd.s32 %s20, 1
      %s22 = scalar_select %p19, %s20, %s21
      %p25 = pneg %p19
      %p26 = scmp.eq.s32.totalorder %s10, 1
      %p27 = por %p25, %p26
      %p28 = scmp.ne.s32.totalorder %s20, %s23
      %p29 = scmp.eq.s32.totalorder %s10, 0
      %p30 = por %p28, %p29
      %p31 = scmp.ne.s32.totalorder %s20, %s23
      %p32 = scmp.eq.s32.totalorder %s15, 1
      %p33 = por %p31, %p32
      %p34 = scmp.ne.s32.totalorder %s23, %s24
      %p35 = scmp.eq.s32.totalorder %s15, 0
      %p36 = por %p34, %p35
      %p37 = scmp.ne.s32.totalorder %s23, %s24
      %p38 = scmp.eq.s32.totalorder %s16, 1
      %p39 = por %p37, %p38
      %p41 = scmp.ne.s32.totalorder %s24, %s40
      %p42 = scmp.eq.s32.totalorder %s16, 0
      %p43 = por %p41, %p42
      %s44 = ssub.s32 %s10, %s17
      %p45 = scmp.eq.s32.totalorder %s44, 0
      %s47 = sadd.s32 %s46, 1
      %s48 = scalar_select %p45, %s46, %s47
      %p51 = pneg %p45
      %p52 = scmp.eq.s32.totalorder %s10, 1
      %p53 = por %p51, %p52
      %p54 = scmp.ne.s32.totalorder %s46, %s49
      %p55 = scmp.eq.s32.totalorder %s10, 0
      %p56 = por %p54, %p55
      %p57 = scmp.ne.s32.totalorder %s46, %s49
      %p58 = scmp.eq.s32.totalorder %s15, 1
      %p59 = por %p57, %p58
      %p60 = scmp.ne.s32.totalorder %s49, %s50
      %p61 = scmp.eq.s32.totalorder %s15, 0
      %p62 = por %p60, %p61
      %p63 = scmp.ne.s32.totalorder %s49, %s50
      %p64 = scmp.eq.s32.totalorder %s16, 1
      %p65 = por %p63, %p64
      %p67 = scmp.ne.s32.totalorder %s50, %s66
      %p68 = scmp.eq.s32.totalorder %s16, 0
      %p69 = por %p67, %p68
      %s71 = sadd.s32 %s70, 1
      %p74 = scmp.eq.s32.totalorder %s10, 1
      %p75 = scmp.ne.s32.totalorder %s70, %s72
      %p76 = scmp.eq.s32.totalorder %s10, 0
      %p77 = por %p75, %p76
      %p78 = scmp.ne.s32.totalorder %s70, %s72
      %p79 = scmp.eq.s32.totalorder %s15, 1
      %p80 = por %p78, %p79
      %p81 = scmp.ne.s32.totalorder %s72, %s73
      %p82 = scmp.eq.s32.totalorder %s15, 0
      %p83 = por %p81, %p82
      %p84 = scmp.ne.s32.totalorder %s72, %s73
      %p85 = scmp.eq.s32.totalorder %s16, 1
      %p86 = por %p84, %p85
      %p88 = scmp.ne.s32.totalorder %s73, %s87
      %p89 = scmp.eq.s32.totalorder %s16, 0
      %p90 = por %p88, %p89
      %s92 = sadd.s32 %s91, 1
      %p95 = scmp.eq.s32.totalorder %s10, 1
      %p96 = scmp.ne.s32.totalorder %s91, %s93
      %p97 = scmp.eq.s32.totalorder %s10, 0
      %p98 = por %p96, %p97
      %p99 = scmp.ne.s32.totalorder %s91, %s93
      %p100 = scmp.eq.s32.totalorder %s15, 1
      %p101 = por %p99, %p100
      %p102 = scmp.ne.s32.totalorder %s93, %s94
      %p103 = scmp.eq.s32.totalorder %s15, 0
      %p104 = por %p102, %p103
      %p105 = scmp.ne.s32.totalorder %s93, %s94
      %p106 = scmp.eq.s32.totalorder %s16, 1
      %p107 = por %p105, %p106
      %p109 = scmp.ne.s32.totalorder %s94, %s108
      %p110 = scmp.eq.s32.totalorder %s16, 0
      %p111 = por %p109, %p110
      %s112 = ssub.s32 %s10, %s17
      %p113 = scmp.eq.s32.totalorder %s112, 0
      %s115 = sadd.s32 %s114, 1
      %s116 = scalar_select %p113, %s114, %s115
      %p119 = pneg %p113
      %p120 = scmp.eq.s32.totalorder %s10, 1
      %p121 = por %p119, %p120
      %p122 = scmp.ne.s32.totalorder %s114, %s117
      %p123 = scmp.eq.s32.totalorder %s10, 0
      %p124 = por %p122, %p123
      %p125 = scmp.ne.s32.totalorder %s114, %s117
      %p126 = scmp.eq.s32.totalorder %s15, 1
      %p127 = por %p125, %p126
      %p128 = scmp.ne.s32.totalorder %s117, %s118
      %p129 = scmp.eq.s32.totalorder %s15, 0
      %p130 = por %p128, %p129
      %p131 = scmp.ne.s32.totalorder %s117, %s118
      %p132 = scmp.eq.s32.totalorder %s16, 1
      %p133 = por %p131, %p132
      %p135 = scmp.ne.s32.totalorder %s118, %s134
      %p136 = scmp.eq.s32.totalorder %s16, 0
      %p137 = por %p135, %p136
      %p138 = scmp.le.s32.totalorder 1, %s10
      %p139 = scmp.lt.s32.totalorder %s10, 3
      %p140 = pnand %p138, %p139
      %p141 = pneg %p140
      // Predicated region
      $region9: #{tpu_custom_call.1} parent=5 // pred_check
        _
      $region10: #{tpu_custom_call.1} parent=5 // pred_check_branch
        %143 = sbr.rel (%p140) target = $region12
      $region11: #{tpu_custom_call.1} parent=5 // pred_region
        %s144 = ssub.s32 %s10, 1
        // Predicated region
        $region13: #{tpu_custom_call.1} parent=11 // pred_check
          %p145 = pneg %p83
        $region14: #{tpu_custom_call.1} parent=11 // pred_check_branch
          %147 = sbr.rel (%p145) target = $region16
        $region15: #{tpu_custom_call.1} parent=11 // pred_region
          _
        $region16: #{tpu_custom_call.1} parent=11 // pred_fallthru
          _
        // Predicated region
        $region17: #{tpu_custom_call.1} parent=11 // pred_check
          %p148 = pneg %p104
        $region18: #{tpu_custom_call.1} parent=11 // pred_check_branch
          %150 = sbr.rel (%p148) target = $region20
        $region19: #{tpu_custom_call.1} parent=11 // pred_region
          _
        $region20: #{tpu_custom_call.1} parent=11 // pred_fallthru
          _
      $region12: #{tpu_custom_call.1} parent=5 // pred_fallthru
        _
      %p151 = scmp.lt.s32.totalorder %s10, 2
      // Predicated region
      $region21: #{tpu_custom_call.1} parent=5 // pred_check
        %p152 = pneg %p151
      $region22: #{tpu_custom_call.1} parent=5 // pred_check_branch
        %154 = sbr.rel (%p152) target = $region24
      $region23: #{tpu_custom_call.1} parent=5 // pred_region
        // Predicated region
        $region25: #{tpu_custom_call.1} parent=23 // pred_check
          %p155 = pneg %p30
        $region26: #{tpu_custom_call.1} parent=23 // pred_check_branch
          %157 = sbr.rel (%p155) target = $region28
        $region27: #{tpu_custom_call.1} parent=23 // pred_region
          %s158 = smul.u32 13, %s10
          %s159 = ssub.s32 25, %s158
          %p160 = scmp.lt.s32.totalorder %s159, 13
          %s161 = scalar_select %p160, %s159, 13
          %s162 = smul.u32 128, %s161
          %s163 = smul.u32 %s162, 2
          %p164 = scmp.lt.s32.totalorder %s158, 24
          %s165 = scalar_select %p164, %s158, 24
          %s166 = smul.addr %s165, 2
          %s167 = smul.addr %s166, 8
          %s168 = scalar_lea.vmem %s0, %s167
          %s169 = smul.u32 13, %s10
          %s170 = ssub.s32 25, %s169
          %p171 = scmp.lt.s32.totalorder %s170, 13
          %s172 = scalar_select %p171, %s170, 13
          %s173 = smul.u32 128, %s172
          %s174 = smul.u32 %s173, 2
        $region28: #{tpu_custom_call.1} parent=23 // pred_fallthru
          _
        // Predicated region
        $region29: #{tpu_custom_call.1} parent=23 // pred_check
          %p175 = pneg %p56
        $region30: #{tpu_custom_call.1} parent=23 // pred_check_branch
          %177 = sbr.rel (%p175) target = $region32
        $region31: #{tpu_custom_call.1} parent=23 // pred_region
          %s178 = smul.u32 13, %s10
          %s179 = ssub.s32 25, %s178
          %p180 = scmp.lt.s32.totalorder %s179, 13
          %s181 = scalar_select %p180, %s179, 13
          %s182 = smul.u32 128, %s181
          %p183 = scmp.lt.s32.totalorder %s178, 24
          %s184 = scalar_select %p183, %s178, 24
          %s185 = smul.addr %s184, 8
          %s186 = scalar_lea.vmem %s1, %s185
          %s187 = smul.u32 13, %s10
          %s188 = ssub.s32 25, %s187
          %p189 = scmp.lt.s32.totalorder %s188, 13
          %s190 = scalar_select %p189, %s188, 13
          %s191 = smul.u32 128, %s190
        $region32: #{tpu_custom_call.1} parent=23 // pred_fallthru
          _
      $region24: #{tpu_custom_call.1} parent=5 // pred_fallthru
        _
      %p192 = scmp.le.s32.totalorder 1, %s10
      %p193 = scmp.lt.s32.totalorder %s10, 3
      %p194 = pnand %p192, %p193
      %p195 = pneg %p194
      // Predicated region
      $region33: #{tpu_custom_call.1} parent=5 // pred_check
        _
      $region34: #{tpu_custom_call.1} parent=5 // pred_check_branch
        %197 = sbr.rel (%p194) target = $region36
      $region35: #{tpu_custom_call.1} parent=5 // pred_region
        %s198 = ssub.s32 %s10, 1
        %s199 = smul.u32 13, %s15
        %s200 = ssub.s32 25, %s199
        %p201 = scmp.lt.s32.totalorder %s200, 13
        %s202 = scalar_select %p201, %s200, 13
        %s203 = smul.u32 128, %s202
        %s204 = smul.u32 %s203, 2
        %p205 = scmp.lt.s32.totalorder %s199, 24
        %s206 = scalar_select %p205, %s199, 24
        %s207 = smul.addr %s206, 2
        %s208 = smul.addr %s207, 8
        %s209 = scalar_lea.vmem %s0, %s208
        %p210 = pneg %p36
        %p211 = pneg %p33
        %s212 = smul.u32 13, %s15
        %s213 = ssub.s32 25, %s212
        %p214 = scmp.lt.s32.totalorder %s213, 13
        %s215 = scalar_select %p214, %s213, 13
        %s216 = smul.u32 128, %s215
        %p217 = scmp.lt.s32.totalorder %s212, 24
        %s218 = scalar_select %p217, %s212, 24
        %s219 = smul.addr %s218, 8
        %s220 = scalar_lea.vmem %s1, %s219
        %p221 = pneg %p62
        %p222 = pneg %p59
        %p223 = pneg %p83
        %p224 = pneg %p80
        %p225 = pneg %p104
        %p226 = pneg %p101
        %p227 = pneg %p130
        %p228 = pneg %p127
        %s229 = sand.u32 %s117, 1
        %s230 = sand.u32 %s117, 1
        %s231 = smul.addr %s230, 104
        %s232 = scalar_lea.vmem [#allocation2], %s231
        %s233 = smul.u32 13, %s15
        %s234 = ssub.s32 25, %s233
        %p235 = scmp.lt.s32.totalorder %s234, 13
        %s236 = scalar_select %p235, %s234, 13
        %s237 = smul.u32 128, %s236
        %s238 = smul.u32 %s237, 2
        %p239 = scmp.lt.s32.totalorder %s233, 24
        %s240 = scalar_select %p239, %s233, 24
        %s241 = smul.addr %s240, 2
        %s242 = smul.addr %s241, 8
        %s243 = scalar_lea.vmem %s0, %s242
        %s244 = smul.u32 13, %s15
        %s245 = ssub.s32 25, %s244
        %p246 = scmp.lt.s32.totalorder %s245, 13
        %s247 = scalar_select %p246, %s245, 13
        %s248 = smul.u32 128, %s247
        %s249 = smul.u32 %s248, 2
        %s250 = smul.u32 13, %s15
        %s251 = ssub.s32 25, %s250
        %p252 = scmp.lt.s32.totalorder %s251, 13
        %s253 = scalar_select %p252, %s251, 13
        %s254 = smul.u32 128, %s253
        %p255 = scmp.lt.s32.totalorder %s250, 24
        %s256 = scalar_select %p255, %s250, 24
        %s257 = smul.addr %s256, 8
        %s258 = scalar_lea.vmem %s1, %s257
        %s259 = smul.u32 13, %s15
        %s260 = ssub.s32 25, %s259
        %p261 = scmp.lt.s32.totalorder %s260, 13
        %s262 = scalar_select %p261, %s260, 13
        %s263 = smul.u32 128, %s262
        %s264 = smul.u32 13, %s15
        %s265 = ssub.s32 25, %s264
        %p266 = scmp.lt.s32.totalorder %s265, 13
        %s267 = scalar_select %p266, %s265, 13
        %s268 = smul.u32 128, %s267
        %v269 = vld [vmem:[%s243] sm:$0xff]
        %v270 = vld [vmem:[%s243 + $0x8] sm:$0xff]
        %v271 = vld [vmem:[%s243 + $0x10] sm:$0xff]
        %v272 = vld [vmem:[%s243 + $0x18] sm:$0xff]
        %v273 = vld [vmem:[%s243 + $0x20] sm:$0xff]
        %v274 = vld [vmem:[%s243 + $0x28] sm:$0xff]
        %v275 = vld [vmem:[%s243 + $0x30] sm:$0xff]
        %v276 = vld [vmem:[%s243 + $0x38] sm:$0xff]
        %v277 = vld [vmem:[%s243 + $0x40] sm:$0xff]
        %v278 = vld [vmem:[%s243 + $0x48] sm:$0xff]
        %v279 = vld [vmem:[%s243 + $0x50] sm:$0xff]
        %v280 = vld [vmem:[%s243 + $0x58] sm:$0xff]
        %v281 = vld [vmem:[%s243 + $0x60] sm:$0xff]
        %v282 = vld [vmem:[%s243 + $0x68] sm:$0xff]
        %v283 = vld [vmem:[%s243 + $0x70] sm:$0xff]
        %v284 = vld [vmem:[%s243 + $0x78] sm:$0xff]
        %v285 = vld [vmem:[%s243 + $0x80] sm:$0xff]
        %v286 = vld [vmem:[%s243 + $0x88] sm:$0xff]
        %v287 = vld [vmem:[%s243 + $0x90] sm:$0xff]
        %v288 = vld [vmem:[%s243 + $0x98] sm:$0xff]
        %v289 = vld [vmem:[%s243 + $0xa0] sm:$0xff]
        %v290 = vld [vmem:[%s243 + $0xa8] sm:$0xff]
        %v291 = vld [vmem:[%s243 + $0xb0] sm:$0xff]
        %v292 = vld [vmem:[%s243 + $0xb8] sm:$0xff]
        %v293 = vld [vmem:[%s243 + $0xc0] sm:$0xff]
        %v294 = vld [vmem:[%s243 + $0xc8] sm:$0xff]
        %v295 = vld [vmem:[%s2] sm:$0xff]
        %v296 = vld [vmem:[%s2 + $0x8] sm:$0xff]
        %v297 = vld [vmem:[%s2 + $0x10] sm:$0xff]
        %v298 = vld [vmem:[%s2 + $0x18] sm:$0xff]
        %v299 = vld [vmem:[%s2 + $0x20] sm:$0xff]
        %v300 = vld [vmem:[%s2 + $0x28] sm:$0xff]
        %v301 = vld [vmem:[%s2 + $0x30] sm:$0xff]
        %v302 = vld [vmem:[%s2 + $0x38] sm:$0xff]
        %v303 = vld [vmem:[%s2 + $0x40] sm:$0xff]
        %v304 = vld [vmem:[%s2 + $0x48] sm:$0xff]
        %v305 = vld [vmem:[%s2 + $0x50] sm:$0xff]
        %v306 = vld [vmem:[%s2 + $0x58] sm:$0xff]
        %v307 = vld [vmem:[%s2 + $0x60] sm:$0xff]
        %v308 = vld [vmem:[%s2 + $0x68] sm:$0xff]
        %v309 = vld [vmem:[%s2 + $0x70] sm:$0xff]
        %v310 = vld [vmem:[%s2 + $0x78] sm:$0xff]
        %v311 = vld [vmem:[%s2 + $0x80] sm:$0xff]
        %v312 = vld [vmem:[%s2 + $0x88] sm:$0xff]
        %v313 = vld [vmem:[%s2 + $0x90] sm:$0xff]
        %v314 = vld [vmem:[%s2 + $0x98] sm:$0xff]
        %v315 = vld [vmem:[%s2 + $0xa0] sm:$0xff]
        %v316 = vld [vmem:[%s2 + $0xa8] sm:$0xff]
        %v317 = vld [vmem:[%s2 + $0xb0] sm:$0xff]
        %v318 = vld [vmem:[%s2 + $0xb8] sm:$0xff]
        %v319 = vld [vmem:[%s2 + $0xc0] sm:$0xff]
        %v320 = vld [vmem:[%s2 + $0xc8] sm:$0xff]
        %v321 = vld [vmem:[%s2 + $0xd0] sm:$0xff]
        %v322 = vld [vmem:[%s2 + $0xd8] sm:$0xff]
        %v323 = vld [vmem:[%s2 + $0xe0] sm:$0xff]
        %v324 = vld [vmem:[%s2 + $0xe8] sm:$0xff]
        %v325 = vld [vmem:[%s2 + $0xf0] sm:$0xff]
        %v326 = vld [vmem:[%s2 + $0xf8] sm:$0xff]
        %v327 = vld [vmem:[%s3] sm:$0x1]
        %v329 = vlaneseq
        %v330 = vshrl.u32 %v329, 7
        %v331 = vsub.s32 0, %v330
        %v332 = vrot.slane %v327, %v331
        %334 = vmatprep.subr.mxu0 0.0
        %335 = vmatpush1.msra.mxu0 %v310
        %336 = vmatprep.subr.mxu0 0.0
        %337 = vmatpush1.msra.mxu0 %v309
        %338 = vmatprep.subr.mxu0 0.0
        %339 = vmatpush1.msra.mxu0 %v308
        %340 = vmatprep.subr.mxu0 0.0
        %341 = vmatpush1.msra.mxu0 %v307
        %342 = vmatprep.subr.mxu0 0.0
        %343 = vmatpush1.msra.mxu0 %v306
        %344 = vmatprep.subr.mxu0 0.0
        %345 = vmatpush1.msra.mxu0 %v305
        %346 = vmatprep.subr.mxu0 0.0
        %347 = vmatpush1.msra.mxu0 %v304
        %348 = vmatprep.subr.mxu0 0.0
        %349 = vmatpush1.msra.mxu0 %v303
        %350 = vmatprep.subr.mxu0 0.0
        %351 = vmatpush1.msra.mxu0 %v302
        %352 = vmatprep.subr.mxu0 0.0
        %353 = vmatpush1.msra.mxu0 %v301
        %354 = vmatprep.subr.mxu0 0.0
        %355 = vmatpush1.msra.mxu0 %v300
        %356 = vmatprep.subr.mxu0 0.0
        %357 = vmatpush1.msra.mxu0 %v299
        %358 = vmatprep.subr.mxu0 0.0
        %359 = vmatpush1.msra.mxu0 %v298
        %360 = vmatprep.subr.mxu0 0.0
        %361 = vmatpush1.msra.mxu0 %v297
        %362 = vmatprep.subr.mxu0 0.0
        %363 = vmatpush1.msra.mxu0 %v296
        %364 = vmatprep.subr.mxu0 0.0
        %365 = vmatpush1.msra.mxu0 %v295
        %366 = vmatprep.subr.mxu0 0.0
        %367 = vmatpush2.msra.mxu0 %v326
        %368 = vmatprep.subr.mxu0 0.0
        %369 = vmatpush2.msra.mxu0 %v325
        %370 = vmatprep.subr.mxu0 0.0
        %371 = vmatpush2.msra.mxu0 %v324
        %372 = vmatprep.subr.mxu0 0.0
        %373 = vmatpush2.msra.mxu0 %v323
        %374 = vmatprep.subr.mxu0 0.0
        %375 = vmatpush2.msra.mxu0 %v322
        %376 = vmatprep.subr.mxu0 0.0
        %377 = vmatpush2.msra.mxu0 %v321
        %378 = vmatprep.subr.mxu0 0.0
        %379 = vmatpush2.msra.mxu0 %v320
        %380 = vmatprep.subr.mxu0 0.0
        %381 = vmatpush2.msra.mxu0 %v319
        %382 = vmatprep.subr.mxu0 0.0
        %383 = vmatpush2.msra.mxu0 %v318
        %384 = vmatprep.subr.mxu0 0.0
        %385 = vmatpush2.msra.mxu0 %v317
        %386 = vmatprep.subr.mxu0 0.0
        %387 = vmatpush2.msra.mxu0 %v316
        %388 = vmatprep.subr.mxu0 0.0
        %389 = vmatpush2.msra.mxu0 %v315
        %390 = vmatprep.subr.mxu0 0.0
        %391 = vmatpush2.msra.mxu0 %v314
        %392 = vmatprep.subr.mxu0 0.0
        %393 = vmatpush2.msra.mxu0 %v313
        %394 = vmatprep.subr.mxu0 0.0
        %395 = vmatpush2.msra.mxu0 %v312
        %396 = vmatprep.subr.mxu0 0.0
        %397 = vmatpush2.msra.mxu0 %v311
        %398 = vmatprep.mubr.f32.mxu0 %v270
        %399 = vmatmul.mubr.f32.gmra.mxu0 %v269
        %v400 = vpop.f32.mrf.mxu0
        %v401 = vadd.f32 %v332, %v400
        %v402 = vpop.f32.mrf.mxu0
        %403 = vmatprep.mubr.f32.mxu0 %v272
        %404 = vmatmul.mubr.f32.gmra.mxu0 %v271
        %v405 = vpop.f32.mrf.mxu0
        %v406 = vadd.f32 %v332, %v405
        %v407 = vpop.f32.mrf.mxu0
        %408 = vmatprep.mubr.f32.mxu0 %v274
        %409 = vmatmul.mubr.f32.gmra.mxu0 %v273
        %v410 = vpop.f32.mrf.mxu0
        %v411 = vadd.f32 %v332, %v410
        %v412 = vpop.f32.mrf.mxu0
        %413 = vmatprep.mubr.f32.mxu0 %v276
        %414 = vmatmul.mubr.f32.gmra.mxu0 %v275
        %v415 = vpop.f32.mrf.mxu0
        %v416 = vadd.f32 %v332, %v415
        %v417 = vpop.f32.mrf.mxu0
        %418 = vmatprep.mubr.f32.mxu0 %v278
        %419 = vmatmul.mubr.f32.gmra.mxu0 %v277
        %v420 = vpop.f32.mrf.mxu0
        %v421 = vadd.f32 %v332, %v420
        %v422 = vpop.f32.mrf.mxu0
        %423 = vmatprep.mubr.f32.mxu0 %v280
        %424 = vmatmul.mubr.f32.gmra.mxu0 %v279
        %v425 = vpop.f32.mrf.mxu0
        %v426 = vadd.f32 %v332, %v425
        %v427 = vpop.f32.mrf.mxu0
        %428 = vmatprep.mubr.f32.mxu0 %v282
        %429 = vmatmul.mubr.f32.gmra.mxu0 %v281
        %v430 = vpop.f32.mrf.mxu0
        %v431 = vadd.f32 %v332, %v430
        %v432 = vpop.f32.mrf.mxu0
        %433 = vmatprep.mubr.f32.mxu0 %v284
        %434 = vmatmul.mubr.f32.gmra.mxu0 %v283
        %v435 = vpop.f32.mrf.mxu0
        %v436 = vadd.f32 %v332, %v435
        %v437 = vpop.f32.mrf.mxu0
        %438 = vmatprep.mubr.f32.mxu0 %v286
        %439 = vmatmul.mubr.f32.gmra.mxu0 %v285
        %v440 = vpop.f32.mrf.mxu0
        %v441 = vadd.f32 %v332, %v440
        %v442 = vpop.f32.mrf.mxu0
        %443 = vmatprep.mubr.f32.mxu0 %v288
        %444 = vmatmul.mubr.f32.gmra.mxu0 %v287
        %v445 = vpop.f32.mrf.mxu0
        %v446 = vadd.f32 %v332, %v445
        %v447 = vpop.f32.mrf.mxu0
        %448 = vmatprep.mubr.f32.mxu0 %v290
        %449 = vmatmul.mubr.f32.gmra.mxu0 %v289
        %v450 = vpop.f32.mrf.mxu0
        %v451 = vadd.f32 %v332, %v450
        %v452 = vpop.f32.mrf.mxu0
        %453 = vmatprep.mubr.f32.mxu0 %v292
        %454 = vmatmul.mubr.f32.gmra.mxu0 %v291
        %v455 = vpop.f32.mrf.mxu0
        %v456 = vadd.f32 %v332, %v455
        %v457 = vpop.f32.mrf.mxu0
        %458 = vmatprep.mubr.f32.mxu0 %v294
        %459 = vmatmul.mubr.f32.gmra.mxu0 %v293
        %v460 = vpop.f32.mrf.mxu0
        %v461 = vadd.f32 %v332, %v460
        %v462 = vpop.f32.mrf.mxu0
        %463 = vdwg.mxu0
        %v464 = vmul.f32 %v401, 1.442695
        %v465 = vpow.pop %v464
        %v466 = vmul.f32 %v406, 1.442695
        %v467 = vpow.pop %v466
        %v468 = vmul.f32 %v411, 1.442695
        %v469 = vpow.pop %v468
        %v470 = vmul.f32 %v416, 1.442695
        %v471 = vpow.pop %v470
        %v472 = vmul.f32 %v421, 1.442695
        %v473 = vpow.pop %v472
        %v474 = vmul.f32 %v426, 1.442695
        %v475 = vpow.pop %v474
        %v476 = vmul.f32 %v431, 1.442695
        %v477 = vpow.pop %v476
        %v478 = vmul.f32 %v436, 1.442695
        %v479 = vpow.pop %v478
        %v480 = vmul.f32 %v441, 1.442695
        %v481 = vpow.pop %v480
        %v482 = vmul.f32 %v446, 1.442695
        %v483 = vpow.pop %v482
        %v484 = vmul.f32 %v451, 1.442695
        %v485 = vpow.pop %v484
        %v486 = vmul.f32 %v456, 1.442695
        %v487 = vpow.pop %v486
        %v488 = vmul.f32 %v461, 1.442695
        %v489 = vpow.pop %v488
        %v490 = vmax.f32 %v465, 0.0
        %v491 = vmax.f32 %v467, 0.0
        %v492 = vmax.f32 %v469, 0.0
        %v493 = vmax.f32 %v471, 0.0
        %v494 = vmax.f32 %v473, 0.0
        %v495 = vmax.f32 %v475, 0.0
        %v496 = vmax.f32 %v477, 0.0
        %v497 = vmax.f32 %v479, 0.0
        %v498 = vmax.f32 %v481, 0.0
        %v499 = vmax.f32 %v483, 0.0
        %v500 = vmax.f32 %v485, 0.0
        %v501 = vmax.f32 %v487, 0.0
        %v502 = vmax.f32 %v489, 0.0
        %v503 = vmin.f32 %v490, 0.02
        %v504 = vmin.f32 %v491, 0.02
        %v505 = vmin.f32 %v492, 0.02
        %v506 = vmin.f32 %v493, 0.02
        %v507 = vmin.f32 %v494, 0.02
        %v508 = vmin.f32 %v495, 0.02
        %v509 = vmin.f32 %v496, 0.02
        %v510 = vmin.f32 %v497, 0.02
        %v511 = vmin.f32 %v498, 0.02
        %v512 = vmin.f32 %v499, 0.02
        %v513 = vmin.f32 %v500, 0.02
        %v514 = vmin.f32 %v501, 0.02
        %v515 = vmin.f32 %v502, 0.02
        %v516 = vmul.f32 %v401, %v401
        %v517 = vmul.f32 %v406, %v406
        %v518 = vmul.f32 %v411, %v411
        %v519 = vmul.f32 %v416, %v416
        %v520 = vmul.f32 %v421, %v421
        %v521 = vmul.f32 %v426, %v426
        %v522 = vmul.f32 %v431, %v431
        %v523 = vmul.f32 %v436, %v436
        %v524 = vmul.f32 %v441, %v441
        %v525 = vmul.f32 %v446, %v446
        %v526 = vmul.f32 %v451, %v451
        %v527 = vmul.f32 %v456, %v456
        %v528 = vmul.f32 %v461, %v461
        %542 = vrot.lane.b32.xlu0 %v516, 125
        %v543 = vpop.permute.xlu0 %542
        %544 = vrot.lane.b32.xlu0 %v517, 125
        %v545 = vpop.permute.xlu0 %544
        %546 = vrot.lane.b32.xlu0 %v518, 125
        %v547 = vpop.permute.xlu0 %546
        %548 = vrot.lane.b32.xlu0 %v519, 125
        %v549 = vpop.permute.xlu0 %548
        %550 = vrot.lane.b32.xlu0 %v520, 125
        %v551 = vpop.permute.xlu0 %550
        %552 = vrot.lane.b32.xlu0 %v521, 125
        %v553 = vpop.permute.xlu0 %552
        %554 = vrot.lane.b32.xlu0 %v522, 125
        %v555 = vpop.permute.xlu0 %554
        %556 = vrot.lane.b32.xlu0 %v523, 125
        %v557 = vpop.permute.xlu0 %556
        %558 = vrot.lane.b32.xlu0 %v524, 125
        %v559 = vpop.permute.xlu0 %558
        %560 = vrot.lane.b32.xlu0 %v525, 125
        %v561 = vpop.permute.xlu0 %560
        %562 = vrot.lane.b32.xlu0 %v526, 125
        %v563 = vpop.permute.xlu0 %562
        %564 = vrot.lane.b32.xlu0 %v527, 125
        %v565 = vpop.permute.xlu0 %564
        %566 = vrot.lane.b32.xlu0 %v528, 125
        %v567 = vpop.permute.xlu0 %566
        %vm581 = vcmask 31744
        %v582 = vsel %vm581, %v543, 0.0
        %583 = vadd.xlane.f32.xlu0 %v582
        %v584 = vpop.xlane.xlu0 %583
        %v585 = vsel %vm581, %v545, 0.0
        %586 = vadd.xlane.f32.xlu0 %v585
        %v587 = vpop.xlane.xlu0 %586
        %v588 = vsel %vm581, %v547, 0.0
        %589 = vadd.xlane.f32.xlu0 %v588
        %v590 = vpop.xlane.xlu0 %589
        %v591 = vsel %vm581, %v549, 0.0
        %592 = vadd.xlane.f32.xlu0 %v591
        %v593 = vpop.xlane.xlu0 %592
        %v594 = vsel %vm581, %v551, 0.0
        %595 = vadd.xlane.f32.xlu0 %v594
        %v596 = vpop.xlane.xlu0 %595
        %v597 = vsel %vm581, %v553, 0.0
        %598 = vadd.xlane.f32.xlu0 %v597
        %v599 = vpop.xlane.xlu0 %598
        %v600 = vsel %vm581, %v555, 0.0
        %601 = vadd.xlane.f32.xlu0 %v600
        %v602 = vpop.xlane.xlu0 %601
        %v603 = vsel %vm581, %v557, 0.0
        %604 = vadd.xlane.f32.xlu0 %v603
        %v605 = vpop.xlane.xlu0 %604
        %v606 = vsel %vm581, %v559, 0.0
        %607 = vadd.xlane.f32.xlu0 %v606
        %v608 = vpop.xlane.xlu0 %607
        %v609 = vsel %vm581, %v561, 0.0
        %610 = vadd.xlane.f32.xlu0 %v609
        %v611 = vpop.xlane.xlu0 %610
        %v612 = vsel %vm581, %v563, 0.0
        %613 = vadd.xlane.f32.xlu0 %v612
        %v614 = vpop.xlane.xlu0 %613
        %v615 = vsel %vm581, %v565, 0.0
        %616 = vadd.xlane.f32.xlu0 %v615
        %v617 = vpop.xlane.xlu0 %616
        %v618 = vsel %vm581, %v567, 0.0
        %619 = vadd.xlane.f32.xlu0 %v618
        %v620 = vpop.xlane.xlu0 %619
        %v621 = vmax.f32 %v584, 1e-24
        %v622 = vmax.f32 %v587, 1e-24
        %v623 = vmax.f32 %v590, 1e-24
        %v624 = vmax.f32 %v593, 1e-24
        %v625 = vmax.f32 %v596, 1e-24
        %v626 = vmax.f32 %v599, 1e-24
        %v627 = vmax.f32 %v602, 1e-24
        %v628 = vmax.f32 %v605, 1e-24
        %v629 = vmax.f32 %v608, 1e-24
        %v630 = vmax.f32 %v611, 1e-24
        %v631 = vmax.f32 %v614, 1e-24
        %v632 = vmax.f32 %v617, 1e-24
        %v633 = vmax.f32 %v620, 1e-24
        %v634 = vrsqrt.pop %v621
        %v635 = vrsqrt.pop %v622
        %v636 = vrsqrt.pop %v623
        %v637 = vrsqrt.pop %v624
        %v638 = vrsqrt.pop %v625
        %v639 = vrsqrt.pop %v626
        %v640 = vrsqrt.pop %v627
        %v641 = vrsqrt.pop %v628
        %v642 = vrsqrt.pop %v629
        %v643 = vrsqrt.pop %v630
        %v644 = vrsqrt.pop %v631
        %v645 = vrsqrt.pop %v632
        %v646 = vrsqrt.pop %v633
        %v647 = vmul.f32 %v401, %v634
        %v648 = vmul.f32 %v406, %v635
        %v649 = vmul.f32 %v411, %v636
        %v650 = vmul.f32 %v416, %v637
        %v651 = vmul.f32 %v421, %v638
        %v652 = vmul.f32 %v426, %v639
        %v653 = vmul.f32 %v431, %v640
        %v654 = vmul.f32 %v436, %v641
        %v655 = vmul.f32 %v441, %v642
        %v656 = vmul.f32 %v446, %v643
        %v657 = vmul.f32 %v451, %v644
        %v658 = vmul.f32 %v456, %v645
        %v659 = vmul.f32 %v461, %v646
        %v660 = vxor.u32 %v401, 2147483648
        %v661 = vxor.u32 %v406, 2147483648
        %v662 = vxor.u32 %v411, 2147483648
        %v663 = vxor.u32 %v416, 2147483648
        %v664 = vxor.u32 %v421, 2147483648
        %v665 = vxor.u32 %v426, 2147483648
        %v666 = vxor.u32 %v431, 2147483648
        %v667 = vxor.u32 %v436, 2147483648
        %v668 = vxor.u32 %v441, 2147483648
        %v669 = vxor.u32 %v446, 2147483648
        %v670 = vxor.u32 %v451, 2147483648
        %v671 = vxor.u32 %v456, 2147483648
        %v672 = vxor.u32 %v461, 2147483648
        %v673 = vmul.f32 %v660, 1.442695
        %v674 = vpow.pop %v673
        %v675 = vmul.f32 %v661, 1.442695
        %v676 = vpow.pop %v675
        %v677 = vmul.f32 %v662, 1.442695
        %v678 = vpow.pop %v677
        %v679 = vmul.f32 %v663, 1.442695
        %v680 = vpow.pop %v679
        %v681 = vmul.f32 %v664, 1.442695
        %v682 = vpow.pop %v681
        %v683 = vmul.f32 %v665, 1.442695
        %v684 = vpow.pop %v683
        %v685 = vmul.f32 %v666, 1.442695
        %v686 = vpow.pop %v685
        %v687 = vmul.f32 %v667, 1.442695
        %v688 = vpow.pop %v687
        %v689 = vmul.f32 %v668, 1.442695
        %v690 = vpow.pop %v689
        %v691 = vmul.f32 %v669, 1.442695
        %v692 = vpow.pop %v691
        %v693 = vmul.f32 %v670, 1.442695
        %v694 = vpow.pop %v693
        %v695 = vmul.f32 %v671, 1.442695
        %v696 = vpow.pop %v695
        %v697 = vmul.f32 %v672, 1.442695
        %v698 = vpow.pop %v697
        %v699 = vadd.f32 %v674, 1.0
        %v700 = vadd.f32 %v676, 1.0
        %v701 = vadd.f32 %v678, 1.0
        %v702 = vadd.f32 %v680, 1.0
        %v703 = vadd.f32 %v682, 1.0
        %v704 = vadd.f32 %v684, 1.0
        %v705 = vadd.f32 %v686, 1.0
        %v706 = vadd.f32 %v688, 1.0
        %v707 = vadd.f32 %v690, 1.0
        %v708 = vadd.f32 %v692, 1.0
        %v709 = vadd.f32 %v694, 1.0
        %v710 = vadd.f32 %v696, 1.0
        %v711 = vadd.f32 %v698, 1.0
        %v712 = vrcp.pop %v699
        %v713 = vmul.f32 1.0, %v712
        %v714 = vrcp.pop %v700
        %v715 = vmul.f32 1.0, %v714
        %v716 = vrcp.pop %v701
        %v717 = vmul.f32 1.0, %v716
        %v718 = vrcp.pop %v702
        %v719 = vmul.f32 1.0, %v718
        %v720 = vrcp.pop %v703
        %v721 = vmul.f32 1.0, %v720
        %v722 = vrcp.pop %v704
        %v723 = vmul.f32 1.0, %v722
        %v724 = vrcp.pop %v705
        %v725 = vmul.f32 1.0, %v724
        %v726 = vrcp.pop %v706
        %v727 = vmul.f32 1.0, %v726
        %v728 = vrcp.pop %v707
        %v729 = vmul.f32 1.0, %v728
        %v730 = vrcp.pop %v708
        %v731 = vmul.f32 1.0, %v730
        %v732 = vrcp.pop %v709
        %v733 = vmul.f32 1.0, %v732
        %v734 = vrcp.pop %v710
        %v735 = vmul.f32 1.0, %v734
        %v736 = vrcp.pop %v711
        %v737 = vmul.f32 1.0, %v736
        %v738 = vsub.f32 %v713, 0.5
        %v739 = vsub.f32 %v715, 0.5
        %v740 = vsub.f32 %v717, 0.5
        %v741 = vsub.f32 %v719, 0.5
        %v742 = vsub.f32 %v721, 0.5
        %v743 = vsub.f32 %v723, 0.5
        %v744 = vsub.f32 %v725, 0.5
        %v745 = vsub.f32 %v727, 0.5
        %v746 = vsub.f32 %v729, 0.5
        %v747 = vsub.f32 %v731, 0.5
        %v748 = vsub.f32 %v733, 0.5
        %v749 = vsub.f32 %v735, 0.5
        %v750 = vsub.f32 %v737, 0.5
        %v751 = vmul.f32 %v738, 0.0375
        %v752 = vmul.f32 %v739, 0.0375
        %v753 = vmul.f32 %v740, 0.0375
        %v754 = vmul.f32 %v741, 0.0375
        %v755 = vmul.f32 %v742, 0.0375
        %v756 = vmul.f32 %v743, 0.0375
        %v757 = vmul.f32 %v744, 0.0375
        %v758 = vmul.f32 %v745, 0.0375
        %v759 = vmul.f32 %v746, 0.0375
        %v760 = vmul.f32 %v747, 0.0375
        %v761 = vmul.f32 %v748, 0.0375
        %v762 = vmul.f32 %v749, 0.0375
        %v763 = vmul.f32 %v750, 0.0375
        %v764 = vld [vmem:[%s258] sm:$0xff]
        %v765 = vld [vmem:[%s258 + $0x8] sm:$0xff]
        %v766 = vld [vmem:[%s258 + $0x10] sm:$0xff]
        %v767 = vld [vmem:[%s258 + $0x18] sm:$0xff]
        %v768 = vld [vmem:[%s258 + $0x20] sm:$0xff]
        %v769 = vld [vmem:[%s258 + $0x28] sm:$0xff]
        %v770 = vld [vmem:[%s258 + $0x30] sm:$0xff]
        %v771 = vld [vmem:[%s258 + $0x38] sm:$0xff]
        %v772 = vld [vmem:[%s258 + $0x40] sm:$0xff]
        %v773 = vld [vmem:[%s258 + $0x48] sm:$0xff]
        %v774 = vld [vmem:[%s258 + $0x50] sm:$0xff]
        %v775 = vld [vmem:[%s258 + $0x58] sm:$0xff]
        %v776 = vld [vmem:[%s258 + $0x60] sm:$0xff]
        %790 = vrot.lane.b32.xlu0 %v764, 11
        %v791 = vpop.permute.xlu0 %790
        %792 = vrot.lane.b32.xlu0 %v765, 11
        %v793 = vpop.permute.xlu0 %792
        %794 = vrot.lane.b32.xlu0 %v766, 11
        %v795 = vpop.permute.xlu0 %794
        %796 = vrot.lane.b32.xlu0 %v767, 11
        %v797 = vpop.permute.xlu0 %796
        %798 = vrot.lane.b32.xlu0 %v768, 11
        %v799 = vpop.permute.xlu0 %798
        %800 = vrot.lane.b32.xlu0 %v769, 11
        %v801 = vpop.permute.xlu0 %800
        %802 = vrot.lane.b32.xlu0 %v770, 11
        %v803 = vpop.permute.xlu0 %802
        %804 = vrot.lane.b32.xlu0 %v771, 11
        %v805 = vpop.permute.xlu0 %804
        %806 = vrot.lane.b32.xlu0 %v772, 11
        %v807 = vpop.permute.xlu0 %806
        %808 = vrot.lane.b32.xlu0 %v773, 11
        %v809 = vpop.permute.xlu0 %808
        %810 = vrot.lane.b32.xlu0 %v774, 11
        %v811 = vpop.permute.xlu0 %810
        %812 = vrot.lane.b32.xlu0 %v775, 11
        %v813 = vpop.permute.xlu0 %812
        %814 = vrot.lane.b32.xlu0 %v776, 11
        %v815 = vpop.permute.xlu0 %814
        %v829 = vadd.f32 %v751, %v791
        %v830 = vadd.f32 %v752, %v793
        %v831 = vadd.f32 %v753, %v795
        %v832 = vadd.f32 %v754, %v797
        %v833 = vadd.f32 %v755, %v799
        %v834 = vadd.f32 %v756, %v801
        %v835 = vadd.f32 %v757, %v803
        %v836 = vadd.f32 %v758, %v805
        %v837 = vadd.f32 %v759, %v807
        %v838 = vadd.f32 %v760, %v809
        %v839 = vadd.f32 %v761, %v811
        %v840 = vadd.f32 %v762, %v813
        %v841 = vadd.f32 %v763, %v815
        %vm842 = vcmask 23552
        %v843 = vsel %vm842, %v503, %v647
        %v844 = vsel %vm842, %v504, %v648
        %v845 = vsel %vm842, %v505, %v649
        %v846 = vsel %vm842, %v506, %v650
        %v847 = vsel %vm842, %v507, %v651
        %v848 = vsel %vm842, %v508, %v652
        %v849 = vsel %vm842, %v509, %v653
        %v850 = vsel %vm842, %v510, %v654
        %v851 = vsel %vm842, %v511, %v655
        %v852 = vsel %vm842, %v512, %v656
        %v853 = vsel %vm842, %v513, %v657
        %v854 = vsel %vm842, %v514, %v658
        %v855 = vsel %vm842, %v515, %v659
        %vm856 = vcmask 56320
        %v857 = vsel %vm856, %v843, %v713
        %v858 = vsel %vm856, %v844, %v715
        %v859 = vsel %vm856, %v845, %v717
        %v860 = vsel %vm856, %v846, %v719
        %v861 = vsel %vm856, %v847, %v721
        %v862 = vsel %vm856, %v848, %v723
        %v863 = vsel %vm856, %v849, %v725
        %v864 = vsel %vm856, %v850, %v727
        %v865 = vsel %vm856, %v851, %v729
        %v866 = vsel %vm856, %v852, %v731
        %v867 = vsel %vm856, %v853, %v733
        %v868 = vsel %vm856, %v854, %v735
        %v869 = vsel %vm856, %v855, %v737
        %vm870 = vcmask 89088
        %v871 = vsel %vm870, %v857, %v829
        %v872 = vsel %vm870, %v858, %v830
        %v873 = vsel %vm870, %v859, %v831
        %v874 = vsel %vm870, %v860, %v832
        %v875 = vsel %vm870, %v861, %v833
        %v876 = vsel %vm870, %v862, %v834
        %v877 = vsel %vm870, %v863, %v835
        %v878 = vsel %vm870, %v864, %v836
        %v879 = vsel %vm870, %v865, %v837
        %v880 = vsel %vm870, %v866, %v838
        %v881 = vsel %vm870, %v867, %v839
        %v882 = vsel %vm870, %v868, %v840
        %v883 = vsel %vm870, %v869, %v841
        %vm884 = vcmask 113664
        %v885 = vsel %vm884, %v871, 0.0
        %v886 = vsel %vm884, %v872, 0.0
        %v887 = vsel %vm884, %v873, 0.0
        %v888 = vsel %vm884, %v874, 0.0
        %v889 = vsel %vm884, %v875, 0.0
        %v890 = vsel %vm884, %v876, 0.0
        %v891 = vsel %vm884, %v877, 0.0
        %v892 = vsel %vm884, %v878, 0.0
        %v893 = vsel %vm884, %v879, 0.0
        %v894 = vsel %vm884, %v880, 0.0
        %v895 = vsel %vm884, %v881, 0.0
        %v896 = vsel %vm884, %v882, 0.0
        %v897 = vsel %vm884, %v883, 0.0
        %vm898 = vcmask 130048
        %899 = vst.msk [vmem:[%s232] sm:$0xff] %vm898, %v885
        %900 = vst.msk [vmem:[%s232 + $0x8] sm:$0xff] %vm898, %v886
        %901 = vst.msk [vmem:[%s232 + $0x10] sm:$0xff] %vm898, %v887
        %902 = vst.msk [vmem:[%s232 + $0x18] sm:$0xff] %vm898, %v888
        %903 = vst.msk [vmem:[%s232 + $0x20] sm:$0xff] %vm898, %v889
        %904 = vst.msk [vmem:[%s232 + $0x28] sm:$0xff] %vm898, %v890
        %905 = vst.msk [vmem:[%s232 + $0x30] sm:$0xff] %vm898, %v891
        %906 = vst.msk [vmem:[%s232 + $0x38] sm:$0xff] %vm898, %v892
        %907 = vst.msk [vmem:[%s232 + $0x40] sm:$0xff] %vm898, %v893
        %908 = vst.msk [vmem:[%s232 + $0x48] sm:$0xff] %vm898, %v894
        %909 = vst.msk [vmem:[%s232 + $0x50] sm:$0xff] %vm898, %v895
        %910 = vst.msk [vmem:[%s232 + $0x58] sm:$0xff] %vm898, %v896
        %911 = vst.msk [vmem:[%s232 + $0x60] sm:$0xff] %vm898, %v897
        %s912 = sand.u32 %s117, 1
        %s913 = sand.u32 %s117, 1
        %s914 = smul.addr %s913, 104
        %s915 = scalar_lea.vmem [#allocation2], %s914
        // Predicated region
        $region37: #{tpu_custom_call.1} parent=35 // pred_check
          %p916 = pneg %p127
        $region38: #{tpu_custom_call.1} parent=35 // pred_check_branch
          %918 = sbr.rel (%p916) target = $region40
        $region39: #{tpu_custom_call.1} parent=35 // pred_region
          %s919 = smul.u32 13, %s15
          %s920 = ssub.s32 25, %s919
          %p921 = scmp.lt.s32.totalorder %s920, 13
          %s922 = scalar_select %p921, %s920, 13
          %s923 = smul.u32 128, %s922
          %p924 = scmp.ne.s32.totalorder 0, %s923
          %s925 = smul.addr %s919, 8
          %s926 = scalar_lea.vmem %s4, %s925
          // Predicated region
          $region41: #{tpu_custom_call.1} parent=39 // pred_check
            %p927 = pneg %p924
          $region42: #{tpu_custom_call.1} parent=39 // pred_check_branch
            %929 = sbr.rel (%p927) target = $region44
          $region43: #{tpu_custom_call.1} parent=39 // pred_region
            // Predicated region
            $region45: #{tpu_custom_call.1} parent=43 // pred_check
              _
            $region46: #{tpu_custom_call.1} parent=43 // pred_check_branch
              %931 = sbr.rel (0) target = $region48
            $region47: #{tpu_custom_call.1} parent=43 // pred_region
              // Predicated region
              $region67: #{tpu_custom_call.1} parent=47 // pred_check
                _
              $region68: #{tpu_custom_call.1} parent=47 // pred_check_branch
                %1006 = sbr.rel (0) target = $region70
              $region69: #{tpu_custom_call.1} parent=47 // pred_region
                %s1007 = sdiv.u32.pop %s922, 13
                %s1008 = srem.u32.pop %s922, 13
                // While loop
                $region71: #{tpu_custom_call.1} parent=69 // loop_pre_header
                  _
                $region72: #{tpu_custom_call.1} parent=69 // loop_header
                  %s1010 = sphi 0, %s1012
                  %p1011 = scmp.ge.s32.totalorder %s1010, %s1007
                  %s1015 = sphi 0, %s1046
                  %s1016 = sphi %s915, %s1049
                  %s1017 = sphi %s926, %s1050
                $region73: #{tpu_custom_call.1} parent=69 // loop_header_branch
                  %1014 = sbr.rel (%p1011) target = $region77
                $region74: #{tpu_custom_call.1} parent=69 // loop_body
                  %v1018 = vld [vmem:[%s1016] sm:$0xff]
                  %1019 = vst [vmem:[%s1017] sm:$0xff] %v1018
                  %v1020 = vld [vmem:[%s1016 + $0x8] sm:$0xff]
                  %1021 = vst [vmem:[%s1017 + $0x8] sm:$0xff] %v1020
                  %v1022 = vld [vmem:[%s1016 + $0x10] sm:$0xff]
                  %1023 = vst [vmem:[%s1017 + $0x10] sm:$0xff] %v1022
                  %v1024 = vld [vmem:[%s1016 + $0x18] sm:$0xff]
                  %1025 = vst [vmem:[%s1017 + $0x18] sm:$0xff] %v1024
                  %v1026 = vld [vmem:[%s1016 + $0x20] sm:$0xff]
                  %1027 = vst [vmem:[%s1017 + $0x20] sm:$0xff] %v1026
                  %v1028 = vld [vmem:[%s1016 + $0x28] sm:$0xff]
                  %1029 = vst [vmem:[%s1017 + $0x28] sm:$0xff] %v1028
                  %v1030 = vld [vmem:[%s1016 + $0x30] sm:$0xff]
                  %1031 = vst [vmem:[%s1017 + $0x30] sm:$0xff] %v1030
                  %v1032 = vld [vmem:[%s1016 + $0x38] sm:$0xff]
                  %1033 = vst [vmem:[%s1017 + $0x38] sm:$0xff] %v1032
                  %v1034 = vld [vmem:[%s1016 + $0x40] sm:$0xff]
                  %1035 = vst [vmem:[%s1017 + $0x40] sm:$0xff] %v1034
                  %v1036 = vld [vmem:[%s1016 + $0x48] sm:$0xff]
                  %1037 = vst [vmem:[%s1017 + $0x48] sm:$0xff] %v1036
                  %v1038 = vld [vmem:[%s1016 + $0x50] sm:$0xff]
                  %1039 = vst [vmem:[%s1017 + $0x50] sm:$0xff] %v1038
                  %v1040 = vld [vmem:[%s1016 + $0x58] sm:$0xff]
                  %1041 = vst [vmem:[%s1017 + $0x58] sm:$0xff] %v1040
                  %v1042 = vld [vmem:[%s1016 + $0x60] sm:$0xff]
                  %1043 = vst [vmem:[%s1017 + $0x60] sm:$0xff] %v1042
                  %s1044 = sadd.s32 1, %s1015
                  %p1045 = scmp.ge.s32.totalorder %s1044, %s1007
                  %s1046 = scalar_select %p1045, 0, %s1044
                  %s1047 = smul.u32 %s1046, 104
                  %s1048 = smul.u32 %s1046, 104
                  %s1049 = scalar_lea.vmem %s915, %s1047 [#allocation2]
                  %s1050 = scalar_lea.vmem %s926, %s1048
                $region75: #{tpu_custom_call.1} parent=69 // loop_footer
                  %s1012 = sadd.s32 %s1010, 1
                $region76: #{tpu_custom_call.1} parent=69 // loop_footer_branch
                  %1009 = sbr.rel target = $region72
                $region77: #{tpu_custom_call.1} parent=69 // loop_exit
                  _
                %s1051 = sdiv.u32.pop %s922, 13
                %s1052 = srem.u32.pop %s922, 13
                %s1053 = smul.u32 %s1051, 13
                %s1054 = smul.u32 8, %s1053
                %s1055 = scalar_lea.vmem %s915, %s1054 [#allocation2]
                %s1056 = smul.u32 8, %s1053
                %s1057 = scalar_lea.vmem %s926, %s1056
                // While loop
                $region78: #{tpu_custom_call.1} parent=69 // loop_pre_header
                  _
                $region79: #{tpu_custom_call.1} parent=69 // loop_header
                  %s1059 = sphi 0, %s1061
                  %p1060 = scmp.ge.s32.totalorder %s1059, %s1052
                  %s1064 = sphi 0, %s1071
                  %s1065 = sphi %s1055, %s1074
                  %s1066 = sphi %s1057, %s1075
                $region80: #{tpu_custom_call.1} parent=69 // loop_header_branch
                  %1063 = sbr.rel (%p1060) target = $region84
                $region81: #{tpu_custom_call.1} parent=69 // loop_body
                  %v1067 = vld [vmem:[%s1065] sm:$0xff]
                  %1068 = vst [vmem:[%s1066] sm:$0xff] %v1067
                  %s1069 = sadd.s32 1, %s1064
                  %p1070 = scmp.ge.s32.totalorder %s1069, %s1052
                  %s1071 = scalar_select %p1070, 0, %s1069
                  %s1072 = smul.u32 %s1071, 8
                  %s1073 = smul.u32 %s1071, 8
                  %s1074 = scalar_lea.vmem %s1055, %s1072 [#allocation2]
                  %s1075 = scalar_lea.vmem %s1057, %s1073
                $region82: #{tpu_custom_call.1} parent=69 // loop_footer
                  %s1061 = sadd.s32 %s1059, 1
                $region83: #{tpu_custom_call.1} parent=69 // loop_footer_branch
                  %1058 = sbr.rel target = $region79
                $region84: #{tpu_custom_call.1} parent=69 // loop_exit
                  _
              $region70: #{tpu_custom_call.1} parent=47 // pred_fallthru
                _
              // Predicated region
              $region85: #{tpu_custom_call.1} parent=47 // pred_check
                _
              $region86: #{tpu_custom_call.1} parent=47 // pred_check_branch
                %1077 = sbr.rel target = $region88
              $region87: #{tpu_custom_call.1} parent=47 // pred_region
                _
              $region88: #{tpu_custom_call.1} parent=47 // pred_fallthru
                _
            $region48: #{tpu_custom_call.1} parent=43 // pred_fallthru
              _
            // Predicated region
            $region49: #{tpu_custom_call.1} parent=43 // pred_check
              _
            $region50: #{tpu_custom_call.1} parent=43 // pred_check_branch
              %933 = sbr.rel target = $region52
            $region51: #{tpu_custom_call.1} parent=43 // pred_region
              %s935 = ssub.s32 256, 1
              %s936 = sdiv.u32.pop %s922, 13
              %s937 = srem.u32.pop %s922, 13
              // While loop
              $region53: #{tpu_custom_call.1} parent=51 // loop_pre_header
                _
              $region54: #{tpu_custom_call.1} parent=51 // loop_header
                %s939 = sphi 0, %s941
                %p940 = scmp.ge.s32.totalorder %s939, %s936
                %s944 = sphi 0, %s975
                %s945 = sphi %s915, %s978
                %s946 = sphi %s926, %s979
              $region55: #{tpu_custom_call.1} parent=51 // loop_header_branch
                %943 = sbr.rel (%p940) target = $region59
              $region56: #{tpu_custom_call.1} parent=51 // loop_body
                %v947 = vld [vmem:[%s945] sm:%s935]
                %948 = vst [vmem:[%s946] sm:%s935] %v947
                %v949 = vld [vmem:[%s945 + $0x8] sm:%s935]
                %950 = vst [vmem:[%s946 + $0x8] sm:%s935] %v949
                %v951 = vld [vmem:[%s945 + $0x10] sm:%s935]
                %952 = vst [vmem:[%s946 + $0x10] sm:%s935] %v951
                %v953 = vld [vmem:[%s945 + $0x18] sm:%s935]
                %954 = vst [vmem:[%s946 + $0x18] sm:%s935] %v953
                %v955 = vld [vmem:[%s945 + $0x20] sm:%s935]
                %956 = vst [vmem:[%s946 + $0x20] sm:%s935] %v955
                %v957 = vld [vmem:[%s945 + $0x28] sm:%s935]
                %958 = vst [vmem:[%s946 + $0x28] sm:%s935] %v957
                %v959 = vld [vmem:[%s945 + $0x30] sm:%s935]
                %960 = vst [vmem:[%s946 + $0x30] sm:%s935] %v959
                %v961 = vld [vmem:[%s945 + $0x38] sm:%s935]
                %962 = vst [vmem:[%s946 + $0x38] sm:%s935] %v961
                %v963 = vld [vmem:[%s945 + $0x40] sm:%s935]
                %964 = vst [vmem:[%s946 + $0x40] sm:%s935] %v963
                %v965 = vld [vmem:[%s945 + $0x48] sm:%s935]
                %966 = vst [vmem:[%s946 + $0x48] sm:%s935] %v965
                %v967 = vld [vmem:[%s945 + $0x50] sm:%s935]
                %968 = vst [vmem:[%s946 + $0x50] sm:%s935] %v967
                %v969 = vld [vmem:[%s945 + $0x58] sm:%s935]
                %970 = vst [vmem:[%s946 + $0x58] sm:%s935] %v969
                %v971 = vld [vmem:[%s945 + $0x60] sm:%s935]
                %972 = vst [vmem:[%s946 + $0x60] sm:%s935] %v971
                %s973 = sadd.s32 1, %s944
                %p974 = scmp.ge.s32.totalorder %s973, %s936
                %s975 = scalar_select %p974, 0, %s973
                %s976 = smul.u32 %s975, 104
                %s977 = smul.u32 %s975, 104
                %s978 = scalar_lea.vmem %s915, %s976 [#allocation2]
                %s979 = scalar_lea.vmem %s926, %s977
              $region57: #{tpu_custom_call.1} parent=51 // loop_footer
                %s941 = sadd.s32 %s939, 1
              $region58: #{tpu_custom_call.1} parent=51 // loop_footer_branch
                %938 = sbr.rel target = $region54
              $region59: #{tpu_custom_call.1} parent=51 // loop_exit
                _
              %s980 = sdiv.u32.pop %s922, 13
              %s981 = srem.u32.pop %s922, 13
              %s982 = smul.u32 %s980, 13
              %s983 = smul.u32 8, %s982
              %s984 = scalar_lea.vmem %s915, %s983 [#allocation2]
              %s985 = smul.u32 8, %s982
              %s986 = scalar_lea.vmem %s926, %s985
              // While loop
              $region60: #{tpu_custom_call.1} parent=51 // loop_pre_header
                _
              $region61: #{tpu_custom_call.1} parent=51 // loop_header
                %s988 = sphi 0, %s990
                %p989 = scmp.ge.s32.totalorder %s988, %s981
                %s993 = sphi 0, %s1000
                %s994 = sphi %s984, %s1003
                %s995 = sphi %s986, %s1004
              $region62: #{tpu_custom_call.1} parent=51 // loop_header_branch
                %992 = sbr.rel (%p989) target = $region66
              $region63: #{tpu_custom_call.1} parent=51 // loop_body
                %v996 = vld [vmem:[%s994] sm:%s935]
                %997 = vst [vmem:[%s995] sm:%s935] %v996
                %s998 = sadd.s32 1, %s993
                %p999 = scmp.ge.s32.totalorder %s998, %s981
                %s1000 = scalar_select %p999, 0, %s998
                %s1001 = smul.u32 %s1000, 8
                %s1002 = smul.u32 %s1000, 8
                %s1003 = scalar_lea.vmem %s984, %s1001 [#allocation2]
                %s1004 = scalar_lea.vmem %s986, %s1002
              $region64: #{tpu_custom_call.1} parent=51 // loop_footer
                %s990 = sadd.s32 %s988, 1
              $region65: #{tpu_custom_call.1} parent=51 // loop_footer_branch
                %987 = sbr.rel target = $region61
              $region66: #{tpu_custom_call.1} parent=51 // loop_exit
                _
            $region52: #{tpu_custom_call.1} parent=43 // pred_fallthru
              _
          $region44: #{tpu_custom_call.1} parent=39 // pred_fallthru
            _
          %1078 = vnop
        $region40: #{tpu_custom_call.1} parent=35 // pred_fallthru
          _
      $region36: #{tpu_custom_call.1} parent=5 // pred_fallthru
        _
      %p1079 = scmp.le.s32.totalorder 2, %s10
      // Predicated region
      $region89: #{tpu_custom_call.1} parent=5 // pred_check
        %p1080 = pneg %p1079
      $region90: #{tpu_custom_call.1} parent=5 // pred_check_branch
        %1082 = sbr.rel (%p1080) target = $region92
      $region91: #{tpu_custom_call.1} parent=5 // pred_region
        %s1083 = ssub.s32 %s10, 2
        // Predicated region
        $region93: #{tpu_custom_call.1} parent=91 // pred_check
          %p1084 = pneg %p133
        $region94: #{tpu_custom_call.1} parent=91 // pred_check_branch
          %1086 = sbr.rel (%p1084) target = $region96
        $region95: #{tpu_custom_call.1} parent=91 // pred_region
          %s1087 = sand.u32 %s118, 1
          %s1088 = sand.u32 %s118, 1
          %s1089 = smul.addr %s1088, 104
          %s1090 = scalar_lea.vmem [#allocation2], %s1089
        $region96: #{tpu_custom_call.1} parent=91 // pred_fallthru
          _
      $region92: #{tpu_custom_call.1} parent=5 // pred_fallthru
        _
    $region6: #{tpu_custom_call.1} parent=1 // loop_footer
      %s14 = sadd.s32 1, %s10
    $region7: #{tpu_custom_call.1} parent=1 // loop_footer_branch
      %9 = sbr.rel target = $region3
    $region8: #{tpu_custom_call.1} parent=1 // loop_exit
      _

</llo_original>
